<compile_context>
chip_gen: v5e
topology: v5e:2x2
jax: 0.10.0
libtpu: 0.0.40
codegen_flags: <defaults>
</compile_context>

<pallas_src>
import jax
import jax.numpy as jnp
from jax.experimental import pallas as pl
from jax.experimental.pallas import tpu as pltpu


_TILE_B = 128        # batch rows per grid step (lane-dense output block width)
_NEG_SLOPE = 0.01    # torch.nn.LeakyReLU default negative_slope


def _disc_kernel(idx_ref, t1_ref, w2_ref, b2_ref, out_ref, x_scratch):
    # idx_ref : SMEM (B_pad,) int32   (scalar prefetch: whole index array)
    # t1_ref  : VMEM (V, D) f32       (folded table emb @ w1 + b1, resident)
    # w2_ref  : VMEM (1, D) f32       (second Linear weight row, resident)
    # b2_ref  : SMEM (1, 1) f32
    # out_ref : VMEM (1, TILE_B) f32  (lane-dense output block for this tile)
    # x_scratch: VMEM (TILE_B, D) f32
    tile = pl.program_id(0)
    tb = x_scratch.shape[0]
    base = tile * tb

    # Gather the folded-table rows for this batch tile (no one-hot, no MXU).
    def gather_row(r, carry):
        tok = idx_ref[base + r]
        x_scratch[pl.ds(r, 1), :] = t1_ref[pl.ds(tok, 1), :]
        return carry

    jax.lax.fori_loop(0, tb, gather_row, 0)

    x = x_scratch[...]                                   # (TB, D)
    h = jnp.where(x > 0, x, _NEG_SLOPE * x)              # LeakyReLU (VPU)

    # Linear(D, 1) as broadcast-multiply + lane reduce (VPU/XLU, not MXU).
    y = jnp.sum(h * w2_ref[...], axis=-1) + b2_ref[0, 0]  # (TB,)
    out_ref[...] = y.reshape(1, tb)                       # lane-dense store


def discriminator_forward(indices, emb, w1, b1, w2, b2):
    """Forward pass of the qGAN Discriminator.

    indices: (B,) integer token ids in [0, 2**data_dim)
    emb: (V, D)   w1: (D, D)   b1: (D,)   w2: (D, 1)   b2: (1,)
    Weights are stored (in, out):  y = LeakyReLU(emb[idx] @ w1 + b1) @ w2 + b2
    Returns (B, 1) float32.
    """
    V, D = emb.shape
    B = indices.shape[0]

    # Fold the first Linear into the embedding table (exact algebraic rewrite).
    t1 = jnp.dot(emb.astype(jnp.float32), w1.astype(jnp.float32),
                 precision=jax.lax.Precision.HIGHEST)
    t1 = t1 + b1.astype(jnp.float32).reshape(1, D)        # (V, D)
    w2_row = w2.astype(jnp.float32).reshape(1, D)          # (1, D)
    b2_2d = b2.astype(jnp.float32).reshape(1, 1)           # (1, 1)

    # Pad the batch to a lane-dense multiple of the tile width; clamp ids so
    # padded rows (and any out-of-range callers) read a valid table row.
    b_pad = _TILE_B * pl.cdiv(B, _TILE_B)
    idx = jnp.clip(indices.astype(jnp.int32), 0, V - 1)
    idx = jnp.pad(idx, (0, b_pad - B))

    grid_spec = pltpu.PrefetchScalarGridSpec(
        num_scalar_prefetch=1,
        grid=(b_pad // _TILE_B,),
        in_specs=[
            pl.BlockSpec((V, D), lambda t, idx_ref: (0, 0)),    # folded table
            pl.BlockSpec((1, D), lambda t, idx_ref: (0, 0)),    # w2 row
            pl.BlockSpec(memory_space=pltpu.MemorySpace.SMEM),  # b2 scalar
        ],
        out_specs=pl.BlockSpec((1, _TILE_B), lambda t, idx_ref: (0, t)),
        scratch_shapes=[pltpu.VMEM((_TILE_B, D), jnp.float32)],
    )

    out_row = pl.pallas_call(
        _disc_kernel,
        out_shape=jax.ShapeDtypeStruct((1, b_pad), jnp.float32),
        grid_spec=grid_spec,
        compiler_params=pltpu.CompilerParams(
            dimension_semantics=("parallel",)),
    )(idx, t1, w2_row, b2_2d)

    return out_row[0, :B].reshape(B, 1)


def _reference_forward(indices, emb, w1, b1, w2, b2):
    x = emb[indices]                                                    # (B, D)
    h = jnp.dot(x, w1, precision=jax.lax.Precision.HIGHEST) + b1
    h = jnp.where(h > 0, h, _NEG_SLOPE * h)
    y = jnp.dot(h, w2, precision=jax.lax.Precision.HIGHEST) + b2.reshape(1, 1)
    return y                                                            # (B, 1)


if __name__ == "__main__":
    data_dim = 8
    num_embeddings = 2 ** data_dim        # 256
    B = 16

    key = jax.random.PRNGKey(0)
    k_emb, k_w1, k_b1, k_w2, k_b2, k_idx = jax.random.split(key, 6)

    # Deterministic synthetic parameters (shapes match nn.Embedding / nn.Linear).
    emb = jax.random.normal(k_emb, (num_embeddings, data_dim), jnp.float32)
    lim1 = 1.0 / jnp.sqrt(data_dim)
    w1 = jax.random.uniform(k_w1, (data_dim, data_dim), jnp.float32, -lim1, lim1)
    b1 = jax.random.uniform(k_b1, (data_dim,), jnp.float32, -lim1, lim1)
    w2 = jax.random.uniform(k_w2, (data_dim, 1), jnp.float32, -lim1, lim1)
    b2 = jax.random.uniform(k_b2, (1,), jnp.float32, -lim1, lim1)

    indices = jax.random.randint(k_idx, (B,), 0, num_embeddings, jnp.int32)

    out = discriminator_forward(indices, emb, w1, b1, w2, b2)
    out = jax.block_until_ready(out)

    ref = _reference_forward(indices, emb, w1, b1, w2, b2)
    assert out.shape == (B, 1), out.shape
    assert jnp.allclose(out, ref, atol=1e-5, rtol=1e-5), "mismatch vs reference"

    print("KERNEL_OK")
</pallas_src>

<mosaic_0001>
module attributes {stable_mosaic.version = 11 : i64} {
  func.func @_disc_kernel(%arg0: i32, %arg1: memref<128xi32, #tpu.memory_space<smem>>, %arg2: memref<256x8xf32, #tpu.memory_space<vmem>>, %arg3: memref<1x8xf32, #tpu.memory_space<vmem>>, %arg4: memref<1x1xf32, #tpu.memory_space<smem>>, %arg5: memref<1x128xf32, #tpu.memory_space<vmem>>, %arg6: memref<128x8xf32, #tpu.memory_space<vmem>>) attributes {dimension_semantics = [#tpu.dimension_semantics<parallel>], iteration_bounds = array<i64: 1>, scalar_prefetch = 1 : i64, scratch_operands = 1 : i64, tpu.core_type = #tpu.core_type<tc>, window_params = [{pipeline_mode = #tpu.pipeline_mode<synchronous>, transform_indices = @transform_0, window_bounds = array<i64: 256, 8>}, {pipeline_mode = #tpu.pipeline_mode<synchronous>, transform_indices = @transform_1, window_bounds = array<i64: 1, 8>}, {transform_indices = @transform_2, window_bounds = array<i64: 1, 1>}, {transform_indices = @transform_3, window_bounds = array<i64: 1, 128>}]} {
    %c128_i32 = arith.constant 128 : i32
    %0 = arith.muli %arg0, %c128_i32 : i32
    %c0_i32 = arith.constant 0 : i32
    %c128_i32_0 = arith.constant 128 : i32
    %1 = arith.addi %c0_i32, %c128_i32_0 : i32
    %c1_i32 = arith.constant 1 : i32
    scf.for %arg7 = %c0_i32 to %1 step %c1_i32  : i32 {
      %17 = arith.addi %0, %arg7 : i32
      %18 = arith.index_cast %17 : i32 to index
      %19 = memref.load %arg1[%18] : memref<128xi32, #tpu.memory_space<smem>>
      %20 = arith.index_cast %19 : i32 to index
      %c0_11 = arith.constant 0 : index
      %21 = vector.load %arg2[%20, %c0_11] : memref<256x8xf32, #tpu.memory_space<vmem>>, vector<1x8xf32>
      %22 = arith.index_cast %arg7 : i32 to index
      %c0_12 = arith.constant 0 : index
      %23 = vector.load %arg6[%22, %c0_12] : memref<128x8xf32, #tpu.memory_space<vmem>>, vector<1x8xf32>
      tpu.vector_store %arg6[%22, %c0_12], %21 {strides = array<i32>} : memref<128x8xf32, #tpu.memory_space<vmem>>, vector<1x8xf32>,
    }
    %c128_i32_1 = arith.constant 128 : i32
    %c0 = arith.constant 0 : index
    %c0_2 = arith.constant 0 : index
    %2 = vector.load %arg6[%c0, %c0_2] : memref<128x8xf32, #tpu.memory_space<vmem>>, vector<128x8xf32>
    %cst = arith.constant 0.000000e+00 : f32
    %3 = vector.broadcast %cst : f32 to vector<128x8xf32>
    %4 = arith.cmpf ogt, %2, %3 : vector<128x8xf32>
    %cst_3 = arith.constant 0.00999999977 : f32
    %5 = vector.broadcast %cst_3 : f32 to vector<128x8xf32>
    %6 = arith.mulf %5, %2 : vector<128x8xf32>
    %7 = arith.select %4, %2, %6 : vector<128x8xi1>, vector<128x8xf32>
    %c0_4 = arith.constant 0 : index
    %c0_5 = arith.constant 0 : index
    %8 = vector.load %arg3[%c0_4, %c0_5] : memref<1x8xf32, #tpu.memory_space<vmem>>, vector<1x8xf32>
    %9 = vector.broadcast %8 : vector<1x8xf32> to vector<128x8xf32>
    %10 = arith.mulf %7, %9 : vector<128x8xf32>
    %cst_6 = arith.constant dense<0.000000e+00> : vector<128xf32>
    %11 = vector.multi_reduction <add>, %10, %cst_6 [1] : vector<128x8xf32> to vector<128xf32>
    %c0_7 = arith.constant 0 : index
    %c0_8 = arith.constant 0 : index
    %12 = memref.load %arg4[%c0_7, %c0_8] : memref<1x1xf32, #tpu.memory_space<smem>>
    %13 = vector.broadcast %12 : f32 to vector<128xf32>
    %14 = arith.addf %11, %13 : vector<128xf32>
    %15 = vector.shape_cast %14 : vector<128xf32> to vector<1x128xf32>
    %c0_9 = arith.constant 0 : index
    %c0_10 = arith.constant 0 : index
    %16 = vector.load %arg5[%c0_9, %c0_10] : memref<1x128xf32, #tpu.memory_space<vmem>>, vector<1x128xf32>
    tpu.vector_store %arg5[%c0_9, %c0_10], %15 {strides = array<i32>} : memref<1x128xf32, #tpu.memory_space<vmem>>, vector<1x128xf32>,
    return
  }
  func.func @transform_0(%arg0: i32, %arg1: memref<128xi32, #tpu.memory_space<smem>>) -> (i32, i32) {
    %c0_i32 = arith.constant 0 : i32
    %c0_i32_0 = arith.constant 0 : i32
    %c0_i32_1 = arith.constant 0 : i32
    return %c0_i32, %c0_i32_0 : i32, i32
  }
  func.func @transform_1(%arg0: i32, %arg1: memref<128xi32, #tpu.memory_space<smem>>) -> (i32, i32) {
    %c0_i32 = arith.constant 0 : i32
    %c0_i32_0 = arith.constant 0 : i32
    %c0_i32_1 = arith.constant 0 : i32
    return %c0_i32, %c0_i32_0 : i32, i32
  }
  func.func @transform_2(%arg0: i32, %arg1: memref<128xi32, #tpu.memory_space<smem>>) -> (i32, i32) {
    %c0_i32 = arith.constant 0 : i32
    %c0_i32_0 = arith.constant 0 : i32
    %c0_i32_1 = arith.constant 0 : i32
    return %c0_i32, %c0_i32_0 : i32, i32
  }
  func.func @transform_3(%arg0: i32, %arg1: memref<128xi32, #tpu.memory_space<smem>>) -> (i32, i32) {
    %c0_i32 = arith.constant 0 : i32
    %c0_i32_0 = arith.constant 0 : i32
    return %c0_i32, %arg0 : i32, i32
  }
}

</mosaic_0001>

<llo_original>
// kernel: tpu_custom_call.1
$region0: #{tpu_custom_call.1}
  #allocation0 [shape = 'u32[]', space=smem, size = 0x4, offset = 0x4, fixed_abs, tag = 'smem constant byte address 0x4 - core index']
  #allocation1 [shape = 'u32[72,128]{1,0:T(1,128)}', space=vmem, size = 0x9000, scoped, tag = 'internal scratch']
  #allocation2 [shape = 'f32[128,8]{1,0:T(8,128)}', space=vmem, size = 0x10000, scoped, tag = 'scratch operand']
  #allocation3 [shape = 's32[1]{0}', space=sflag, size = 0x4, scoped, tag = 'scoped memory for tpu_custom_call.1']
  #allocation4 [shape = 'u8[512]{0}', space=smem, size = 0x200, scoped, tag = 'prefetched SMEM operand 0']
  #allocation5 [shape = 'f32[1,1]{1,0:T(1,128)S(6)}', space=smem, size = 0x200, scoped, tag = 'scoped memory for tpu_custom_call.1']
  %s0 = inlined_call_operand.vmem [shape: s32[128], index: 0, kind: input, shape index: {}]
  %s1 = inlined_call_operand.vmem [shape: f32[256,8], index: 1, kind: input, shape index: {}]
  %s2 = inlined_call_operand.vmem [shape: f32[1,8], index: 2, kind: input, shape index: {}]
  %s3 = inlined_call_operand.<no memory space> [shape: f32[1,1], index: 3, kind: input, shape index: {}]
  %s4 = inlined_call_operand.hbm [shape: f32[1,128], index: 4, kind: output, shape index: {}]
  %s5 = sld [smem:[#allocation0]]
  $region29: #{tpu_custom_call.1} parent=0
    _
  %s7 = ssub.s32 1, %s5
  %s8 = scalar_select 0, %s7, %s5
  %s10 = sshll.u32 %s0, 4
  %s11 = int_to_ptr.vmem [resolvable:$true] %s10
  %13 = dma.vmem_to_smem %s11, 16, [#allocation4], [#allocation3]
  %14 = sst [smem:[#allocation5]] %s3
  %16 = dma.done [#allocation3], 16
  %17 = sfence
  $region1: #{tpu_custom_call.1} parent=0
    #allocation6 [shape = 'u8[512]{0}', space=vmem, size = 0x400, scoped, tag = 'output window, operand 0, single buffered']
    #allocation7 [shape = 's32[1]{0}', space=sflag, size = 0x4, scoped, tag = 'scoped memory for tpu_custom_call.1']
    %18 = vsyncpa [#allocation7], 0
    // Predicated region
    $region2: #{tpu_custom_call.1} parent=1 // pred_check
      _
    $region3: #{tpu_custom_call.1} parent=1 // pred_check_branch
      %20 = sbr.rel (0) target = $region5
    $region4: #{tpu_custom_call.1} parent=1 // pred_region
      _
    $region5: #{tpu_custom_call.1} parent=1 // pred_fallthru
      _
    // Predicated region
    $region6: #{tpu_custom_call.1} parent=1 // pred_check
      _
    $region7: #{tpu_custom_call.1} parent=1 // pred_check_branch
      %22 = sbr.rel (0) target = $region9
    $region8: #{tpu_custom_call.1} parent=1 // pred_region
      _
    $region9: #{tpu_custom_call.1} parent=1 // pred_fallthru
      _
    // Predicated region
    $region10: #{tpu_custom_call.1} parent=1 // pred_check
      _
    $region11: #{tpu_custom_call.1} parent=1 // pred_check_branch
      %24 = sbr.rel (0) target = $region13
    $region12: #{tpu_custom_call.1} parent=1 // pred_region
      _
    $region13: #{tpu_custom_call.1} parent=1 // pred_fallthru
      _
    %s25 = smul.u32 0, 128
    loop: start=0, step=1, limit=128
    $region14: #{tpu_custom_call.1} parent=1 // loop_pre_header
      _
    $region15: #{tpu_custom_call.1} parent=1 // loop_header
      %s27 = sphi 0, %s31
      %p28 = scmp.ge.s32.totalorder %s27, 128
    $region16: #{tpu_custom_call.1} parent=1 // loop_header_branch
      %30 = sbr.rel (%p28) target = $region20
    $region17: #{tpu_custom_call.1} parent=1 // loop_body
      %s32 = sadd.s32 %s25, %s27
      %s33 = sld [smem:[#allocation4 + %s32]]
      %s34 = scalar_lea.vmem %s1, %s33
      %v35 = vld [vmem:[%s34] sm:$0x1]
      %s36 = scalar_lea.vmem [#allocation2], %s27
      %vm37 = vcmask 57344
      %38 = vst.msk [vmem:[%s36] sm:$0x1] %vm37, %v35
    $region18: #{tpu_custom_call.1} parent=1 // loop_footer
      %s31 = sadd.s32 1, %s27
    $region19: #{tpu_custom_call.1} parent=1 // loop_footer_branch
      %26 = sbr.rel target = $region15
    $region20: #{tpu_custom_call.1} parent=1 // loop_exit
      _
    %v39 = vld [vmem:[#allocation2] sm:$0xff]
    %v40 = vld [vmem:[#allocation2 + $0x8] sm:$0xff]
    %v41 = vld [vmem:[#allocation2 + $0x10] sm:$0xff]
    %v42 = vld [vmem:[#allocation2 + $0x18] sm:$0xff]
    %v43 = vld [vmem:[#allocation2 + $0x20] sm:$0xff]
    %v44 = vld [vmem:[#allocation2 + $0x28] sm:$0xff]
    %v45 = vld [vmem:[#allocation2 + $0x30] sm:$0xff]
    %v46 = vld [vmem:[#allocation2 + $0x38] sm:$0xff]
    %v47 = vld [vmem:[#allocation2 + $0x40] sm:$0xff]
    %v48 = vld [vmem:[#allocation2 + $0x48] sm:$0xff]
    %v49 = vld [vmem:[#allocation2 + $0x50] sm:$0xff]
    %v50 = vld [vmem:[#allocation2 + $0x58] sm:$0xff]
    %v51 = vld [vmem:[#allocation2 + $0x60] sm:$0xff]
    %v52 = vld [vmem:[#allocation2 + $0x68] sm:$0xff]
    %v53 = vld [vmem:[#allocation2 + $0x70] sm:$0xff]
    %v54 = vld [vmem:[#allocation2 + $0x78] sm:$0xff]
    %vm55 = vcmp.gt.f32.partialorder %v39, 0.0
    %vm56 = vcmp.gt.f32.partialorder %v40, 0.0
    %vm57 = vcmp.gt.f32.partialorder %v41, 0.0
    %vm58 = vcmp.gt.f32.partialorder %v42, 0.0
    %vm59 = vcmp.gt.f32.partialorder %v43, 0.0
    %vm60 = vcmp.gt.f32.partialorder %v44, 0.0
    %vm61 = vcmp.gt.f32.partialorder %v45, 0.0
    %vm62 = vcmp.gt.f32.partialorder %v46, 0.0
    %vm63 = vcmp.gt.f32.partialorder %v47, 0.0
    %vm64 = vcmp.gt.f32.partialorder %v48, 0.0
    %vm65 = vcmp.gt.f32.partialorder %v49, 0.0
    %vm66 = vcmp.gt.f32.partialorder %v50, 0.0
    %vm67 = vcmp.gt.f32.partialorder %v51, 0.0
    %vm68 = vcmp.gt.f32.partialorder %v52, 0.0
    %vm69 = vcmp.gt.f32.partialorder %v53, 0.0
    %vm70 = vcmp.gt.f32.partialorder %v54, 0.0
    %v71 = vmul.f32 %v39, 0.01
    %v72 = vmul.f32 %v40, 0.01
    %v73 = vmul.f32 %v41, 0.01
    %v74 = vmul.f32 %v42, 0.01
    %v75 = vmul.f32 %v43, 0.01
    %v76 = vmul.f32 %v44, 0.01
    %v77 = vmul.f32 %v45, 0.01
    %v78 = vmul.f32 %v46, 0.01
    %v79 = vmul.f32 %v47, 0.01
    %v80 = vmul.f32 %v48, 0.01
    %v81 = vmul.f32 %v49, 0.01
    %v82 = vmul.f32 %v50, 0.01
    %v83 = vmul.f32 %v51, 0.01
    %v84 = vmul.f32 %v52, 0.01
    %v85 = vmul.f32 %v53, 0.01
    %v86 = vmul.f32 %v54, 0.01
    %v87 = vsel %vm55, %v39, %v71
    %v88 = vsel %vm56, %v40, %v72
    %v89 = vsel %vm57, %v41, %v73
    %v90 = vsel %vm58, %v42, %v74
    %v91 = vsel %vm59, %v43, %v75
    %v92 = vsel %vm60, %v44, %v76
    %v93 = vsel %vm61, %v45, %v77
    %v94 = vsel %vm62, %v46, %v78
    %v95 = vsel %vm63, %v47, %v79
    %v96 = vsel %vm64, %v48, %v80
    %v97 = vsel %vm65, %v49, %v81
    %v98 = vsel %vm66, %v50, %v82
    %v99 = vsel %vm67, %v51, %v83
    %v100 = vsel %vm68, %v52, %v84
    %v101 = vsel %vm69, %v53, %v85
    %v102 = vsel %vm70, %v54, %v86
    %v103 = vld [vmem:[%s2] sm:$0x1]
    %v105 = vperm.slane %v103, 0
    %v107 = vmul.f32 %v87, %v105
    %v108 = vmul.f32 %v88, %v105
    %v109 = vmul.f32 %v89, %v105
    %v110 = vmul.f32 %v90, %v105
    %v111 = vmul.f32 %v91, %v105
    %v112 = vmul.f32 %v92, %v105
    %v113 = vmul.f32 %v93, %v105
    %v114 = vmul.f32 %v94, %v105
    %v115 = vmul.f32 %v95, %v105
    %v116 = vmul.f32 %v96, %v105
    %v117 = vmul.f32 %v97, %v105
    %v118 = vmul.f32 %v98, %v105
    %v119 = vmul.f32 %v99, %v105
    %v120 = vmul.f32 %v100, %v105
    %v121 = vmul.f32 %v101, %v105
    %v122 = vmul.f32 %v102, %v105
    %vm123 = vcmask 64512
    %v124 = vsel %vm123, %v107, 0.0
    %125 = vadd.xlane.f32.xlu0 %v124
    %v126 = vpop.xlane.xlu0 %125
    %v127 = vsel %vm123, %v108, 0.0
    %128 = vadd.xlane.f32.xlu0 %v127
    %v129 = vpop.xlane.xlu0 %128
    %v130 = vsel %vm123, %v109, 0.0
    %131 = vadd.xlane.f32.xlu0 %v130
    %v132 = vpop.xlane.xlu0 %131
    %v133 = vsel %vm123, %v110, 0.0
    %134 = vadd.xlane.f32.xlu0 %v133
    %v135 = vpop.xlane.xlu0 %134
    %v136 = vsel %vm123, %v111, 0.0
    %137 = vadd.xlane.f32.xlu0 %v136
    %v138 = vpop.xlane.xlu0 %137
    %v139 = vsel %vm123, %v112, 0.0
    %140 = vadd.xlane.f32.xlu0 %v139
    %v141 = vpop.xlane.xlu0 %140
    %v142 = vsel %vm123, %v113, 0.0
    %143 = vadd.xlane.f32.xlu0 %v142
    %v144 = vpop.xlane.xlu0 %143
    %v145 = vsel %vm123, %v114, 0.0
    %146 = vadd.xlane.f32.xlu0 %v145
    %v147 = vpop.xlane.xlu0 %146
    %v148 = vsel %vm123, %v115, 0.0
    %149 = vadd.xlane.f32.xlu0 %v148
    %v150 = vpop.xlane.xlu0 %149
    %v151 = vsel %vm123, %v116, 0.0
    %152 = vadd.xlane.f32.xlu0 %v151
    %v153 = vpop.xlane.xlu0 %152
    %v154 = vsel %vm123, %v117, 0.0
    %155 = vadd.xlane.f32.xlu0 %v154
    %v156 = vpop.xlane.xlu0 %155
    %v157 = vsel %vm123, %v118, 0.0
    %158 = vadd.xlane.f32.xlu0 %v157
    %v159 = vpop.xlane.xlu0 %158
    %v160 = vsel %vm123, %v119, 0.0
    %161 = vadd.xlane.f32.xlu0 %v160
    %v162 = vpop.xlane.xlu0 %161
    %v163 = vsel %vm123, %v120, 0.0
    %164 = vadd.xlane.f32.xlu0 %v163
    %v165 = vpop.xlane.xlu0 %164
    %v166 = vsel %vm123, %v121, 0.0
    %167 = vadd.xlane.f32.xlu0 %v166
    %v168 = vpop.xlane.xlu0 %167
    %v169 = vsel %vm123, %v122, 0.0
    %170 = vadd.xlane.f32.xlu0 %v169
    %v171 = vpop.xlane.xlu0 %170
    %s172 = sld [smem:[#allocation5]]
    %v173 = vstv %s172
    %v174 = vadd.f32 %v126, %v173
    %v175 = vadd.f32 %v129, %v173
    %v176 = vadd.f32 %v132, %v173
    %v177 = vadd.f32 %v135, %v173
    %v178 = vadd.f32 %v138, %v173
    %v179 = vadd.f32 %v141, %v173
    %v180 = vadd.f32 %v144, %v173
    %v181 = vadd.f32 %v147, %v173
    %v182 = vadd.f32 %v150, %v173
    %v183 = vadd.f32 %v153, %v173
    %v184 = vadd.f32 %v156, %v173
    %v185 = vadd.f32 %v159, %v173
    %v186 = vadd.f32 %v162, %v173
    %v187 = vadd.f32 %v165, %v173
    %v188 = vadd.f32 %v168, %v173
    %v189 = vadd.f32 %v171, %v173
    %v206 = vlaneseq
    %v207 = vand.u32 %v206, 127
    %v208 = vperm.slane %v174, %v207
    %v209 = vadd.s32 %v207, 4294967288
    %v210 = vperm.slane %v175, %v209
    %vm211 = vcmask 130112
    %v212 = vsel %vm211, %v210, %v208
    %v213 = vadd.s32 %v207, 4294967280
    %v214 = vperm.slane %v176, %v213
    %vm215 = vcmask 195712
    %v216 = vsel %vm215, %v214, %v212
    %v217 = vadd.s32 %v207, 4294967272
    %v218 = vperm.slane %v177, %v217
    %vm219 = vcmask 261312
    %v220 = vsel %vm219, %v218, %v216
    %v221 = vadd.s32 %v207, 4294967264
    %v222 = vperm.slane %v178, %v221
    %vm223 = vcmask 326912
    %v224 = vsel %vm223, %v222, %v220
    %v225 = vadd.s32 %v207, 4294967256
    %v226 = vperm.slane %v179, %v225
    %vm227 = vcmask 392512
    %v228 = vsel %vm227, %v226, %v224
    %v229 = vadd.s32 %v207, 4294967248
    %v230 = vperm.slane %v180, %v229
    %vm231 = vcmask 458112
    %v232 = vsel %vm231, %v230, %v228
    %v233 = vadd.s32 %v207, 4294967240
    %v234 = vperm.slane %v181, %v233
    %vm235 = vcmask 523712
    %v236 = vsel %vm235, %v234, %v232
    %v237 = vadd.s32 %v207, 4294967232
    %v238 = vperm.slane %v182, %v237
    %vm239 = vcmask 589312
    %v240 = vsel %vm239, %v238, %v236
    %v241 = vadd.s32 %v207, 4294967224
    %v242 = vperm.slane %v183, %v241
    %vm243 = vcmask 654912
    %v244 = vsel %vm243, %v242, %v240
    %v245 = vadd.s32 %v207, 4294967216
    %v246 = vperm.slane %v184, %v245
    %vm247 = vcmask 720512
    %v248 = vsel %vm247, %v246, %v244
    %v249 = vadd.s32 %v207, 4294967208
    %v250 = vperm.slane %v185, %v249
    %vm251 = vcmask 786112
    %v252 = vsel %vm251, %v250, %v248
    %v253 = vadd.s32 %v207, 4294967200
    %v254 = vperm.slane %v186, %v253
    %vm255 = vcmask 851712
    %v256 = vsel %vm255, %v254, %v252
    %v257 = vadd.s32 %v207, 4294967192
    %v258 = vperm.slane %v187, %v257
    %vm259 = vcmask 917312
    %v260 = vsel %vm259, %v258, %v256
    %v261 = vadd.s32 %v207, 4294967184
    %v262 = vperm.slane %v188, %v261
    %vm263 = vcmask 982912
    %v264 = vsel %vm263, %v262, %v260
    %v265 = vadd.s32 %v207, 4294967176
    %v266 = vperm.slane %v189, %v265
    %vm267 = vcmask 1048512
    %v268 = vsel %vm267, %v266, %v264
    %270 = vst [vmem:[#allocation6] sm:$0x1] %v268
    // Predicated region
    $region21: #{tpu_custom_call.1} parent=1 // pred_check
      _
    $region22: #{tpu_custom_call.1} parent=1 // pred_check_branch
      %272 = sbr.rel (0) target = $region24
    $region23: #{tpu_custom_call.1} parent=1 // pred_region
      %274 = vsyncadd [#allocation7], 0
      %s276 = sshll.u32 [#allocation6], 4
      %s277 = int_to_ptr.vmem [resolvable:$true] %s276
      %s278 = sshll.u32 %s4, 4
      %s279 = int_to_ptr.hbm [resolvable:$true] %s278
      %281 = dma.vmem_to_hbm [thread:$0]  %s277, 16, %s279, [#allocation7]
    $region24: #{tpu_custom_call.1} parent=1 // pred_fallthru
      _
    // Predicated region
    $region25: #{tpu_custom_call.1} parent=1 // pred_check
      _
    $region26: #{tpu_custom_call.1} parent=1 // pred_check_branch
      %283 = sbr.rel (0) target = $region28
    $region27: #{tpu_custom_call.1} parent=1 // pred_region
      %285 = dma.done [#allocation7], 16
    $region28: #{tpu_custom_call.1} parent=1 // pred_fallthru
      _
    %286 = vsyncpa [#allocation7], 1

</llo_original>
